<compile_context>
chip_gen: v6e
topology: v6e:2x2x1
jax: 0.10.0
libtpu: 0.0.40
codegen_flags: <defaults>
</compile_context>

<pallas_src>
import functools
import math

import jax
import jax.numpy as jnp
from jax.experimental import pallas as pl
from jax.experimental.pallas import tpu as pltpu


def _round_up(x, m):
    return ((x + m - 1) // m) * m


# ----------------------------------------------------------------------------
# Fused MLP kernel:  h = x ; for each layer: h = [relu](h @ W_T + b) ; o = h
# ----------------------------------------------------------------------------
def _fused_mlp_kernel(*refs, n_layers, relu_flags, compute_dtype):
    x_ref = refs[0]
    w_refs = refs[1:1 + n_layers]
    b_refs = refs[1 + n_layers:1 + 2 * n_layers]
    o_ref = refs[1 + 2 * n_layers]

    cdt = jnp.dtype(compute_dtype)
    h = x_ref[...].astype(jnp.float32)
    for i in range(n_layers):                       # statically unrolled
        lhs = h.astype(cdt)
        rhs = w_refs[i][...].astype(cdt)
        acc = jnp.dot(lhs, rhs, preferred_element_type=jnp.float32)  # MXU, f32 acc
        acc = acc + b_refs[i][...]                  # f32 epilogue (bias bcast once/layer)
        if relu_flags[i]:
            acc = jnp.maximum(acc, 0.0)             # VPU
        h = acc
    o_ref[...] = h.astype(o_ref.dtype)


def fused_mlp_pallas(x, ws, bs, meta, compute_dtype="float32"):
    """x: [B, K0] f32.  ws[i]: [Ki_pad, Ni_pad] zero-padded W_T.  bs[i]: [1, Ni_pad].
    meta[i] = (K_i, N_i, relu_i) true (unpadded) dims + activation flag."""
    B, K0 = x.shape
    n_layers = len(ws)
    K0_pad = ws[0].shape[0]
    N_last = meta[-1][1]
    N_last_pad = ws[-1].shape[1]

    # Batch tiling: lane-dense outputs are guaranteed by the 128-padded feature
    # dims; the batch (sublane) axis is padded to >=8 and tiled in blocks of up
    # to 128 rows, with the block axis marked "parallel" (megacore on v7x).
    BB = 128 if B >= 128 else _round_up(max(B, 1), 8)
    B_pad = _round_up(B, BB)

    x_p = jnp.zeros((B_pad, K0_pad), x.dtype).at[:B, :K0].set(x)

    kernel = functools.partial(
        _fused_mlp_kernel,
        n_layers=n_layers,
        relu_flags=tuple(m[2] for m in meta),
        compute_dtype=compute_dtype,
    )

    in_specs = [pl.BlockSpec((BB, K0_pad), lambda i: (i, 0))]
    for w in ws:
        in_specs.append(pl.BlockSpec(w.shape, lambda i: (0, 0)))
    for b in bs:
        in_specs.append(pl.BlockSpec(b.shape, lambda i: (0, 0)))

    out = pl.pallas_call(
        kernel,
        out_shape=jax.ShapeDtypeStruct((B_pad, N_last_pad), x.dtype),
        grid=(B_pad // BB,),
        in_specs=in_specs,
        out_specs=pl.BlockSpec((BB, N_last_pad), lambda i: (i, 0)),
        compiler_params=pltpu.CompilerParams(
            dimension_semantics=("parallel",)),
    )(x_p, *ws, *bs)

    return out[:B, :N_last]


# ----------------------------------------------------------------------------
# Parameter construction (mirrors AutoEncoder.__init__ init scheme)
# ----------------------------------------------------------------------------
def _layer_plan(num_input, num_node, num_feature, num_output, num_dec_node):
    enc = []
    if num_node != []:
        enc.append((num_input, num_node[0], "kaiming", True))
        for i in range(len(num_node) - 1):
            enc.append((num_node[i], num_node[i + 1], "kaiming", True))
        enc.append((num_node[-1], num_feature, "small", False))
    else:
        enc.append((num_input, num_feature, "kaiming", True))

    num_dn = list(reversed(num_node)) if num_dec_node == "none" else num_dec_node
    dec = []
    if num_dn != []:
        dec.append((num_feature, num_dn[0], "kaiming", True))
        for j in range(len(num_dn) - 1):
            dec.append((num_dn[j], num_dn[j + 1], "kaiming", True))
        dec.append((num_dn[-1], num_output, "small", False))
    else:
        dec.append((num_feature, num_output, "small", False))
    return enc, dec


def build_autoencoder_params(key, num_input, num_node, num_feature, num_output,
                             num_dec_node="none"):
    """Returns ((enc_ws, enc_bs, enc_meta), (dec_ws, dec_bs, dec_meta)).

    ws: tuple of zero-padded W_T [K_pad, N_pad] (K_pad/N_pad multiples of 128);
    bs: tuple of zero-padded biases [1, N_pad];
    meta: static tuple of (K, N, relu) per layer.
    """
    enc_plan, dec_plan = _layer_plan(num_input, num_node, num_feature,
                                     num_output, num_dec_node)
    plan = enc_plan + dec_plan
    keys = jax.random.split(key, 2 * len(plan))

    def make_layer(idx, in_f, out_f, init, relu):
        kw, kb = keys[2 * idx], keys[2 * idx + 1]
        if init == "kaiming":
            # PyTorch kaiming_normal_ default: fan_in mode, gain=sqrt(2)
            std = math.sqrt(2.0 / in_f)
        else:
            std = 0.01
        w = std * jax.random.normal(kw, (out_f, in_f), dtype=jnp.float32)
        bound = 1.0 / math.sqrt(in_f)   # nn.Linear default bias init
        b = jax.random.uniform(kb, (out_f,), dtype=jnp.float32,
                               minval=-bound, maxval=bound)
        k_pad = _round_up(in_f, 128)
        n_pad = _round_up(out_f, 128)
        w_t = jnp.zeros((k_pad, n_pad), jnp.float32).at[:in_f, :out_f].set(w.T)
        b_p = jnp.zeros((1, n_pad), jnp.float32).at[0, :out_f].set(b)
        return w_t, b_p, (in_f, out_f, relu)

    def build(sub_plan, offset):
        ws, bs, meta = [], [], []
        for i, (in_f, out_f, init, relu) in enumerate(sub_plan):
            w_t, b_p, m = make_layer(offset + i, in_f, out_f, init, relu)
            ws.append(w_t); bs.append(b_p); meta.append(m)
        return tuple(ws), tuple(bs), tuple(meta)

    enc = build(enc_plan, 0)
    dec = build(dec_plan, len(enc_plan))
    return enc, dec


# ----------------------------------------------------------------------------
# Forward pass (matches AutoEncoder.forward(x, decoder=...)), jitted end-to-end
# ----------------------------------------------------------------------------
@functools.partial(jax.jit,
                   static_argnames=("enc_meta", "dec_meta", "decoder",
                                    "compute_dtype"))
def autoencoder_forward(enc_ws, enc_bs, dec_ws, dec_bs, x, *,
                        enc_meta, dec_meta, decoder=False,
                        compute_dtype="float32"):
    r = fused_mlp_pallas(x, enc_ws, enc_bs, enc_meta, compute_dtype)
    if decoder:
        rec = fused_mlp_pallas(r, dec_ws, dec_bs, dec_meta, compute_dtype)
        return r, rec
    return r, None


# Pure-JAX reference (uses the unpadded slices of the same weights).
def autoencoder_reference(enc, dec, x, decoder=False):
    def run(ws, bs, meta, h):
        for w, b, (k, n, relu) in zip(ws, bs, meta):
            h = h @ w[:k, :n] + b[0, :n]
            if relu:
                h = jnp.maximum(h, 0.0)
        return h
    r = run(*enc, x)
    rec = run(*dec, r) if decoder else None
    return r, rec


# ----------------------------------------------------------------------------
if __name__ == "__main__":
    key = jax.random.PRNGKey(0)
    k_param, k_x = jax.random.split(key)

    # Small shapes consistent with the module's MLP structure.
    batch = 8
    num_input = 32
    num_node = [64, 32]
    num_feature = 16
    num_output = 32

    enc, dec = build_autoencoder_params(
        k_param, num_input, num_node, num_feature, num_output,
        num_dec_node="none")
    enc_ws, enc_bs, enc_meta = enc
    dec_ws, dec_bs, dec_meta = dec

    x = jax.random.normal(k_x, (batch, num_input), dtype=jnp.float32)

    # f32 path (matches PyTorch numerics)
    r, rec = autoencoder_forward(enc_ws, enc_bs, dec_ws, dec_bs, x,
                                 enc_meta=enc_meta, dec_meta=dec_meta,
                                 decoder=True)
    jax.block_until_ready(r)
    jax.block_until_ready(rec)
    assert r.shape == (batch, num_feature), r.shape
    assert rec.shape == (batch, num_output), rec.shape

    r_ref, rec_ref = autoencoder_reference(enc, dec, x, decoder=True)
    assert bool(jnp.allclose(r, r_ref, rtol=1e-5, atol=1e-5)), "encoder mismatch"
    assert bool(jnp.allclose(rec, rec_ref, rtol=1e-5, atol=1e-5)), "decoder mismatch"

    # decoder=False path (returns (r, None))
    r_only, none_out = autoencoder_forward(enc_ws, enc_bs, dec_ws, dec_bs, x,
                                           enc_meta=enc_meta, dec_meta=dec_meta,
                                           decoder=False)
    jax.block_until_ready(r_only)
    assert none_out is None
    assert bool(jnp.allclose(r_only, r_ref, rtol=1e-5, atol=1e-5))

    # bf16 matmul-operand path (f32 accumulate/epilogue) — v6e/v7x MXU friendly.
    r_bf, rec_bf = autoencoder_forward(enc_ws, enc_bs, dec_ws, dec_bs, x,
                                       enc_meta=enc_meta, dec_meta=dec_meta,
                                       decoder=True, compute_dtype="bfloat16")
    jax.block_until_ready(rec_bf)
    assert bool(jnp.allclose(r_bf, r_ref, rtol=5e-2, atol=5e-2))
    assert bool(jnp.allclose(rec_bf, rec_ref, rtol=5e-2, atol=5e-2))

    print("KERNEL_OK")
</pallas_src>

<mosaic_0001>
module attributes {stable_mosaic.version = 11 : i64} {
  func.func @_fused_mlp_kernel(%arg0: i32, %arg1: memref<8x128xf32, #tpu.memory_space<vmem>>, %arg2: memref<128x128xf32, #tpu.memory_space<vmem>>, %arg3: memref<128x128xf32, #tpu.memory_space<vmem>>, %arg4: memref<128x128xf32, #tpu.memory_space<vmem>>, %arg5: memref<1x128xf32, #tpu.memory_space<vmem>>, %arg6: memref<1x128xf32, #tpu.memory_space<vmem>>, %arg7: memref<1x128xf32, #tpu.memory_space<vmem>>, %arg8: memref<8x128xf32, #tpu.memory_space<vmem>>) attributes {dimension_semantics = [#tpu.dimension_semantics<parallel>], iteration_bounds = array<i64: 1>, scalar_prefetch = 0 : i64, scratch_operands = 0 : i64, tpu.core_type = #tpu.core_type<tc>, window_params = [{transform_indices = @transform_0, window_bounds = array<i64: 8, 128>}, {pipeline_mode = #tpu.pipeline_mode<synchronous>, transform_indices = @transform_1, window_bounds = array<i64: 128, 128>}, {pipeline_mode = #tpu.pipeline_mode<synchronous>, transform_indices = @transform_2, window_bounds = array<i64: 128, 128>}, {pipeline_mode = #tpu.pipeline_mode<synchronous>, transform_indices = @transform_3, window_bounds = array<i64: 128, 128>}, {pipeline_mode = #tpu.pipeline_mode<synchronous>, transform_indices = @transform_4, window_bounds = array<i64: 1, 128>}, {pipeline_mode = #tpu.pipeline_mode<synchronous>, transform_indices = @transform_5, window_bounds = array<i64: 1, 128>}, {pipeline_mode = #tpu.pipeline_mode<synchronous>, transform_indices = @transform_6, window_bounds = array<i64: 1, 128>}, {transform_indices = @transform_7, window_bounds = array<i64: 8, 128>}]} {
    %c0 = arith.constant 0 : index
    %c0_0 = arith.constant 0 : index
    %0 = vector.load %arg1[%c0, %c0_0] : memref<8x128xf32, #tpu.memory_space<vmem>>, vector<8x128xf32>
    %c0_1 = arith.constant 0 : index
    %c0_2 = arith.constant 0 : index
    %1 = vector.load %arg2[%c0_1, %c0_2] : memref<128x128xf32, #tpu.memory_space<vmem>>, vector<128x128xf32>
    %cst = arith.constant dense<0.000000e+00> : vector<8x128xf32>
    %2 = tpu.matmul %0, %1, %cst {dimension_numbers = #tpu.dot_dimension_numbers<[1], [0], [0], [1], [0, 0, 1, 1], [], []>} : vector<8x128xf32>, vector<128x128xf32>, vector<8x128xf32> -> vector<8x128xf32>
    %c0_3 = arith.constant 0 : index
    %c0_4 = arith.constant 0 : index
    %3 = vector.load %arg5[%c0_3, %c0_4] : memref<1x128xf32, #tpu.memory_space<vmem>>, vector<1x128xf32>
    %4 = vector.broadcast %3 : vector<1x128xf32> to vector<8x128xf32>
    %5 = arith.addf %2, %4 : vector<8x128xf32>
    %cst_5 = arith.constant 0.000000e+00 : f32
    %6 = vector.broadcast %cst_5 : f32 to vector<8x128xf32>
    %7 = arith.maximumf %5, %6 : vector<8x128xf32>
    %c0_6 = arith.constant 0 : index
    %c0_7 = arith.constant 0 : index
    %8 = vector.load %arg3[%c0_6, %c0_7] : memref<128x128xf32, #tpu.memory_space<vmem>>, vector<128x128xf32>
    %cst_8 = arith.constant dense<0.000000e+00> : vector<8x128xf32>
    %9 = tpu.matmul %7, %8, %cst_8 {dimension_numbers = #tpu.dot_dimension_numbers<[1], [0], [0], [1], [0, 0, 1, 1], [], []>} : vector<8x128xf32>, vector<128x128xf32>, vector<8x128xf32> -> vector<8x128xf32>
    %c0_9 = arith.constant 0 : index
    %c0_10 = arith.constant 0 : index
    %10 = vector.load %arg6[%c0_9, %c0_10] : memref<1x128xf32, #tpu.memory_space<vmem>>, vector<1x128xf32>
    %11 = vector.broadcast %10 : vector<1x128xf32> to vector<8x128xf32>
    %12 = arith.addf %9, %11 : vector<8x128xf32>
    %cst_11 = arith.constant 0.000000e+00 : f32
    %13 = vector.broadcast %cst_11 : f32 to vector<8x128xf32>
    %14 = arith.maximumf %12, %13 : vector<8x128xf32>
    %c0_12 = arith.constant 0 : index
    %c0_13 = arith.constant 0 : index
    %15 = vector.load %arg4[%c0_12, %c0_13] : memref<128x128xf32, #tpu.memory_space<vmem>>, vector<128x128xf32>
    %cst_14 = arith.constant dense<0.000000e+00> : vector<8x128xf32>
    %16 = tpu.matmul %14, %15, %cst_14 {dimension_numbers = #tpu.dot_dimension_numbers<[1], [0], [0], [1], [0, 0, 1, 1], [], []>} : vector<8x128xf32>, vector<128x128xf32>, vector<8x128xf32> -> vector<8x128xf32>
    %c0_15 = arith.constant 0 : index
    %c0_16 = arith.constant 0 : index
    %17 = vector.load %arg7[%c0_15, %c0_16] : memref<1x128xf32, #tpu.memory_space<vmem>>, vector<1x128xf32>
    %18 = vector.broadcast %17 : vector<1x128xf32> to vector<8x128xf32>
    %19 = arith.addf %16, %18 : vector<8x128xf32>
    %c0_17 = arith.constant 0 : index
    %c0_18 = arith.constant 0 : index
    %20 = vector.load %arg8[%c0_17, %c0_18] : memref<8x128xf32, #tpu.memory_space<vmem>>, vector<8x128xf32>
    tpu.vector_store %arg8[%c0_17, %c0_18], %19 {strides = array<i32>} : memref<8x128xf32, #tpu.memory_space<vmem>>, vector<8x128xf32>,
    return
  }
  func.func @transform_0(%arg0: i32) -> (i32, i32) {
    %c0_i32 = arith.constant 0 : i32
    %c0_i32_0 = arith.constant 0 : i32
    return %arg0, %c0_i32 : i32, i32
  }
  func.func @transform_1(%arg0: i32) -> (i32, i32) {
    %c0_i32 = arith.constant 0 : i32
    %c0_i32_0 = arith.constant 0 : i32
    %c0_i32_1 = arith.constant 0 : i32
    return %c0_i32, %c0_i32_0 : i32, i32
  }
  func.func @transform_2(%arg0: i32) -> (i32, i32) {
    %c0_i32 = arith.constant 0 : i32
    %c0_i32_0 = arith.constant 0 : i32
    %c0_i32_1 = arith.constant 0 : i32
    return %c0_i32, %c0_i32_0 : i32, i32
  }
  func.func @transform_3(%arg0: i32) -> (i32, i32) {
    %c0_i32 = arith.constant 0 : i32
    %c0_i32_0 = arith.constant 0 : i32
    %c0_i32_1 = arith.constant 0 : i32
    return %c0_i32, %c0_i32_0 : i32, i32
  }
  func.func @transform_4(%arg0: i32) -> (i32, i32) {
    %c0_i32 = arith.constant 0 : i32
    %c0_i32_0 = arith.constant 0 : i32
    %c0_i32_1 = arith.constant 0 : i32
    return %c0_i32, %c0_i32_0 : i32, i32
  }
  func.func @transform_5(%arg0: i32) -> (i32, i32) {
    %c0_i32 = arith.constant 0 : i32
    %c0_i32_0 = arith.constant 0 : i32
    %c0_i32_1 = arith.constant 0 : i32
    return %c0_i32, %c0_i32_0 : i32, i32
  }
  func.func @transform_6(%arg0: i32) -> (i32, i32) {
    %c0_i32 = arith.constant 0 : i32
    %c0_i32_0 = arith.constant 0 : i32
    %c0_i32_1 = arith.constant 0 : i32
    return %c0_i32, %c0_i32_0 : i32, i32
  }
  func.func @transform_7(%arg0: i32) -> (i32, i32) {
    %c0_i32 = arith.constant 0 : i32
    %c0_i32_0 = arith.constant 0 : i32
    return %arg0, %c0_i32 : i32, i32
  }
}

module attributes {stable_mosaic.version = 11 : i64} {
  func.func @_fused_mlp_kernel(%arg0: i32, %arg1: memref<8x128xf32, #tpu.memory_space<vmem>>, %arg2: memref<128x128xf32, #tpu.memory_space<vmem>>, %arg3: memref<128x128xf32, #tpu.memory_space<vmem>>, %arg4: memref<128x128xf32, #tpu.memory_space<vmem>>, %arg5: memref<1x128xf32, #tpu.memory_space<vmem>>, %arg6: memref<1x128xf32, #tpu.memory_space<vmem>>, %arg7: memref<1x128xf32, #tpu.memory_space<vmem>>, %arg8: memref<8x128xf32, #tpu.memory_space<vmem>>) attributes {dimension_semantics = [#tpu.dimension_semantics<parallel>], iteration_bounds = array<i64: 1>, scalar_prefetch = 0 : i64, scratch_operands = 0 : i64, tpu.core_type = #tpu.core_type<tc>, window_params = [{transform_indices = @transform_0, window_bounds = array<i64: 8, 128>}, {pipeline_mode = #tpu.pipeline_mode<synchronous>, transform_indices = @transform_1, window_bounds = array<i64: 128, 128>}, {pipeline_mode = #tpu.pipeline_mode<synchronous>, transform_indices = @transform_2, window_bounds = array<i64: 128, 128>}, {pipeline_mode = #tpu.pipeline_mode<synchronous>, transform_indices = @transform_3, window_bounds = array<i64: 128, 128>}, {pipeline_mode = #tpu.pipeline_mode<synchronous>, transform_indices = @transform_4, window_bounds = array<i64: 1, 128>}, {pipeline_mode = #tpu.pipeline_mode<synchronous>, transform_indices = @transform_5, window_bounds = array<i64: 1, 128>}, {pipeline_mode = #tpu.pipeline_mode<synchronous>, transform_indices = @transform_6, window_bounds = array<i64: 1, 128>}, {transform_indices = @transform_7, window_bounds = array<i64: 8, 128>}]} {
    %c0 = arith.constant 0 : index
    %c0_0 = arith.constant 0 : index
    %0 = vector.load %arg1[%c0, %c0_0] : memref<8x128xf32, #tpu.memory_space<vmem>>, vector<8x128xf32>
    %c0_1 = arith.constant 0 : index
    %c0_2 = arith.constant 0 : index
    %1 = vector.load %arg2[%c0_1, %c0_2] : memref<128x128xf32, #tpu.memory_space<vmem>>, vector<128x128xf32>
    %cst = arith.constant dense<0.000000e+00> : vector<8x128xf32>
    %2 = tpu.matmul %0, %1, %cst {dimension_numbers = #tpu.dot_dimension_numbers<[1], [0], [0], [1], [0, 0, 1, 1], [], []>} : vector<8x128xf32>, vector<128x128xf32>, vector<8x128xf32> -> vector<8x128xf32>
    %c0_3 = arith.constant 0 : index
    %c0_4 = arith.constant 0 : index
    %3 = vector.load %arg5[%c0_3, %c0_4] : memref<1x128xf32, #tpu.memory_space<vmem>>, vector<1x128xf32>
    %4 = vector.broadcast %3 : vector<1x128xf32> to vector<8x128xf32>
    %5 = arith.addf %2, %4 : vector<8x128xf32>
    %cst_5 = arith.constant 0.000000e+00 : f32
    %6 = vector.broadcast %cst_5 : f32 to vector<8x128xf32>
    %7 = arith.maximumf %5, %6 : vector<8x128xf32>
    %c0_6 = arith.constant 0 : index
    %c0_7 = arith.constant 0 : index
    %8 = vector.load %arg3[%c0_6, %c0_7] : memref<128x128xf32, #tpu.memory_space<vmem>>, vector<128x128xf32>
    %cst_8 = arith.constant dense<0.000000e+00> : vector<8x128xf32>
    %9 = tpu.matmul %7, %8, %cst_8 {dimension_numbers = #tpu.dot_dimension_numbers<[1], [0], [0], [1], [0, 0, 1, 1], [], []>} : vector<8x128xf32>, vector<128x128xf32>, vector<8x128xf32> -> vector<8x128xf32>
    %c0_9 = arith.constant 0 : index
    %c0_10 = arith.constant 0 : index
    %10 = vector.load %arg6[%c0_9, %c0_10] : memref<1x128xf32, #tpu.memory_space<vmem>>, vector<1x128xf32>
    %11 = vector.broadcast %10 : vector<1x128xf32> to vector<8x128xf32>
    %12 = arith.addf %9, %11 : vector<8x128xf32>
    %cst_11 = arith.constant 0.000000e+00 : f32
    %13 = vector.broadcast %cst_11 : f32 to vector<8x128xf32>
    %14 = arith.maximumf %12, %13 : vector<8x128xf32>
    %c0_12 = arith.constant 0 : index
    %c0_13 = arith.constant 0 : index
    %15 = vector.load %arg4[%c0_12, %c0_13] : memref<128x128xf32, #tpu.memory_space<vmem>>, vector<128x128xf32>
    %cst_14 = arith.constant dense<0.000000e+00> : vector<8x128xf32>
    %16 = tpu.matmul %14, %15, %cst_14 {dimension_numbers = #tpu.dot_dimension_numbers<[1], [0], [0], [1], [0, 0, 1, 1], [], []>} : vector<8x128xf32>, vector<128x128xf32>, vector<8x128xf32> -> vector<8x128xf32>
    %c0_15 = arith.constant 0 : index
    %c0_16 = arith.constant 0 : index
    %17 = vector.load %arg7[%c0_15, %c0_16] : memref<1x128xf32, #tpu.memory_space<vmem>>, vector<1x128xf32>
    %18 = vector.broadcast %17 : vector<1x128xf32> to vector<8x128xf32>
    %19 = arith.addf %16, %18 : vector<8x128xf32>
    %c0_17 = arith.constant 0 : index
    %c0_18 = arith.constant 0 : index
    %20 = vector.load %arg8[%c0_17, %c0_18] : memref<8x128xf32, #tpu.memory_space<vmem>>, vector<8x128xf32>
    tpu.vector_store %arg8[%c0_17, %c0_18], %19 {strides = array<i32>} : memref<8x128xf32, #tpu.memory_space<vmem>>, vector<8x128xf32>,
    return
  }
  func.func @transform_0(%arg0: i32) -> (i32, i32) {
    %c0_i32 = arith.constant 0 : i32
    %c0_i32_0 = arith.constant 0 : i32
    return %arg0, %c0_i32 : i32, i32
  }
  func.func @transform_1(%arg0: i32) -> (i32, i32) {
    %c0_i32 = arith.constant 0 : i32
    %c0_i32_0 = arith.constant 0 : i32
    %c0_i32_1 = arith.constant 0 : i32
    return %c0_i32, %c0_i32_0 : i32, i32
  }
  func.func @transform_2(%arg0: i32) -> (i32, i32) {
    %c0_i32 = arith.constant 0 : i32
    %c0_i32_0 = arith.constant 0 : i32
    %c0_i32_1 = arith.constant 0 : i32
    return %c0_i32, %c0_i32_0 : i32, i32
  }
  func.func @transform_3(%arg0: i32) -> (i32, i32) {
    %c0_i32 = arith.constant 0 : i32
    %c0_i32_0 = arith.constant 0 : i32
    %c0_i32_1 = arith.constant 0 : i32
    return %c0_i32, %c0_i32_0 : i32, i32
  }
  func.func @transform_4(%arg0: i32) -> (i32, i32) {
    %c0_i32 = arith.constant 0 : i32
    %c0_i32_0 = arith.constant 0 : i32
    %c0_i32_1 = arith.constant 0 : i32
    return %c0_i32, %c0_i32_0 : i32, i32
  }
  func.func @transform_5(%arg0: i32) -> (i32, i32) {
    %c0_i32 = arith.constant 0 : i32
    %c0_i32_0 = arith.constant 0 : i32
    %c0_i32_1 = arith.constant 0 : i32
    return %c0_i32, %c0_i32_0 : i32, i32
  }
  func.func @transform_6(%arg0: i32) -> (i32, i32) {
    %c0_i32 = arith.constant 0 : i32
    %c0_i32_0 = arith.constant 0 : i32
    %c0_i32_1 = arith.constant 0 : i32
    return %c0_i32, %c0_i32_0 : i32, i32
  }
  func.func @transform_7(%arg0: i32) -> (i32, i32) {
    %c0_i32 = arith.constant 0 : i32
    %c0_i32_0 = arith.constant 0 : i32
    return %arg0, %c0_i32 : i32, i32
  }
}

</mosaic_0001>

<llo_original>
// kernel: autoencoder_forward.3
$region0: #{autoencoder_forward.3}
  #allocation0 [shape = 'u32[]', space=smem, size = 0x4, offset = 0x4, fixed_abs, tag = 'smem constant byte address 0x4 - core index']
  #allocation1 [shape = 'u32[144,128]{1,0:T(1,128)}', space=vmem, size = 0x12000, scoped, tag = 'internal scratch']
  %s0 = inlined_call_operand.vmem [shape: f32[8,128], index: 0, kind: input, shape index: {}]
  %s1 = inlined_call_operand.vmem [shape: f32[128,128], index: 1, kind: input, shape index: {}]
  %s2 = inlined_call_operand.vmem [shape: f32[128,128], index: 2, kind: input, shape index: {}]
  %s3 = inlined_call_operand.vmem [shape: f32[128,128], index: 3, kind: input, shape index: {}]
  %s4 = inlined_call_operand.vmem [shape: f32[1,128], index: 4, kind: input, shape index: {}]
  %s5 = inlined_call_operand.vmem [shape: f32[1,128], index: 5, kind: input, shape index: {}]
  %s6 = inlined_call_operand.vmem [shape: f32[1,128], index: 6, kind: input, shape index: {}]
  %s7 = inlined_call_operand.hbm [shape: f32[8,128], index: 7, kind: output, shape index: {}]
  %s8 = sld [smem:[#allocation0]]
  $region38: #{autoencoder_forward.3} parent=0
    _
  %s10 = ssub.s32 1, %s8
  %s11 = scalar_select 0, %s10, %s8
  $region1: #{autoencoder_forward.3} parent=0
    #allocation2 [shape = 'u8[4096]{0}', space=vmem, size = 0x1000, scoped, tag = 'output window, operand 0, single buffered']
    #allocation3 [shape = 's32[1]{0}', space=sflag, size = 0x4, scoped, tag = 'scoped memory for autoencoder_forward.3']
    %12 = vsyncpa [#allocation3], 0
    // Predicated region
    $region2: #{autoencoder_forward.3} parent=1 // pred_check
      _
    $region3: #{autoencoder_forward.3} parent=1 // pred_check_branch
      %14 = sbr.rel (0) target = $region5
    $region4: #{autoencoder_forward.3} parent=1 // pred_region
      _
    $region5: #{autoencoder_forward.3} parent=1 // pred_fallthru
      _
    // Predicated region
    $region6: #{autoencoder_forward.3} parent=1 // pred_check
      _
    $region7: #{autoencoder_forward.3} parent=1 // pred_check_branch
      %16 = sbr.rel (0) target = $region9
    $region8: #{autoencoder_forward.3} parent=1 // pred_region
      _
    $region9: #{autoencoder_forward.3} parent=1 // pred_fallthru
      _
    // Predicated region
    $region10: #{autoencoder_forward.3} parent=1 // pred_check
      _
    $region11: #{autoencoder_forward.3} parent=1 // pred_check_branch
      %18 = sbr.rel (0) target = $region13
    $region12: #{autoencoder_forward.3} parent=1 // pred_region
      _
    $region13: #{autoencoder_forward.3} parent=1 // pred_fallthru
      _
    // Predicated region
    $region14: #{autoencoder_forward.3} parent=1 // pred_check
      _
    $region15: #{autoencoder_forward.3} parent=1 // pred_check_branch
      %20 = sbr.rel (0) target = $region17
    $region16: #{autoencoder_forward.3} parent=1 // pred_region
      _
    $region17: #{autoencoder_forward.3} parent=1 // pred_fallthru
      _
    // Predicated region
    $region18: #{autoencoder_forward.3} parent=1 // pred_check
      _
    $region19: #{autoencoder_forward.3} parent=1 // pred_check_branch
      %22 = sbr.rel (0) target = $region21
    $region20: #{autoencoder_forward.3} parent=1 // pred_region
      _
    $region21: #{autoencoder_forward.3} parent=1 // pred_fallthru
      _
    // Predicated region
    $region22: #{autoencoder_forward.3} parent=1 // pred_check
      _
    $region23: #{autoencoder_forward.3} parent=1 // pred_check_branch
      %24 = sbr.rel (0) target = $region25
    $region24: #{autoencoder_forward.3} parent=1 // pred_region
      _
    $region25: #{autoencoder_forward.3} parent=1 // pred_fallthru
      _
    // Predicated region
    $region26: #{autoencoder_forward.3} parent=1 // pred_check
      _
    $region27: #{autoencoder_forward.3} parent=1 // pred_check_branch
      %26 = sbr.rel (0) target = $region29
    $region28: #{autoencoder_forward.3} parent=1 // pred_region
      _
    $region29: #{autoencoder_forward.3} parent=1 // pred_fallthru
      _
    %v27 = vld [vmem:[%s0] sm:$0xff]
    %v28 = vld [vmem:[%s1] sm:$0xff]
    %v29 = vld [vmem:[%s1 + $0x8] sm:$0xff]
    %v30 = vld [vmem:[%s1 + $0x10] sm:$0xff]
    %v31 = vld [vmem:[%s1 + $0x18] sm:$0xff]
    %v32 = vld [vmem:[%s1 + $0x20] sm:$0xff]
    %v33 = vld [vmem:[%s1 + $0x28] sm:$0xff]
    %v34 = vld [vmem:[%s1 + $0x30] sm:$0xff]
    %v35 = vld [vmem:[%s1 + $0x38] sm:$0xff]
    %v36 = vld [vmem:[%s1 + $0x40] sm:$0xff]
    %v37 = vld [vmem:[%s1 + $0x48] sm:$0xff]
    %v38 = vld [vmem:[%s1 + $0x50] sm:$0xff]
    %v39 = vld [vmem:[%s1 + $0x58] sm:$0xff]
    %v40 = vld [vmem:[%s1 + $0x60] sm:$0xff]
    %v41 = vld [vmem:[%s1 + $0x68] sm:$0xff]
    %v42 = vld [vmem:[%s1 + $0x70] sm:$0xff]
    %v43 = vld [vmem:[%s1 + $0x78] sm:$0xff]
    %v44 = vld [vmem:[%s4] sm:$0x1]
    %v46 = vlaneseq
    %v47 = vshrl.u32 %v46, 7
    %v48 = vsub.s32 0, %v47
    %v49 = vrot.slane %v44, %v48
    %51 = vmatprep.subr.mxu0 0.0
    %52 = vmatpush1.msra.mxu0 %v43
    %53 = vmatprep.subr.mxu0 0.0
    %54 = vmatpush1.msra.mxu0 %v42
    %55 = vmatprep.subr.mxu0 0.0
    %56 = vmatpush1.msra.mxu0 %v41
    %57 = vmatprep.subr.mxu0 0.0
    %58 = vmatpush1.msra.mxu0 %v40
    %59 = vmatprep.subr.mxu0 0.0
    %60 = vmatpush1.msra.mxu0 %v39
    %61 = vmatprep.subr.mxu0 0.0
    %62 = vmatpush1.msra.mxu0 %v38
    %63 = vmatprep.subr.mxu0 0.0
    %64 = vmatpush1.msra.mxu0 %v37
    %65 = vmatprep.subr.mxu0 0.0
    %66 = vmatpush1.msra.mxu0 %v36
    %67 = vmatprep.subr.mxu0 0.0
    %68 = vmatpush1.msra.mxu0 %v35
    %69 = vmatprep.subr.mxu0 0.0
    %70 = vmatpush1.msra.mxu0 %v34
    %71 = vmatprep.subr.mxu0 0.0
    %72 = vmatpush1.msra.mxu0 %v33
    %73 = vmatprep.subr.mxu0 0.0
    %74 = vmatpush1.msra.mxu0 %v32
    %75 = vmatprep.subr.mxu0 0.0
    %76 = vmatpush1.msra.mxu0 %v31
    %77 = vmatprep.subr.mxu0 0.0
    %78 = vmatpush1.msra.mxu0 %v30
    %79 = vmatprep.subr.mxu0 0.0
    %80 = vmatpush1.msra.mxu0 %v29
    %81 = vmatprep.subr.mxu0 0.0
    %82 = vmatpush1.msra.mxu0 %v28
    %83 = vmatprep.subr.mxu0 0.0
    %84 = vmatpush2.msra.mxu0 0.0
    %85 = vmatprep.subr.mxu0 0.0
    %86 = vmatpush2.msra.mxu0 0.0
    %87 = vmatprep.subr.mxu0 0.0
    %88 = vmatpush2.msra.mxu0 0.0
    %89 = vmatprep.subr.mxu0 0.0
    %90 = vmatpush2.msra.mxu0 0.0
    %91 = vmatprep.subr.mxu0 0.0
    %92 = vmatpush2.msra.mxu0 0.0
    %93 = vmatprep.subr.mxu0 0.0
    %94 = vmatpush2.msra.mxu0 0.0
    %95 = vmatprep.subr.mxu0 0.0
    %96 = vmatpush2.msra.mxu0 0.0
    %97 = vmatprep.subr.mxu0 0.0
    %98 = vmatpush2.msra.mxu0 0.0
    %99 = vmatprep.subr.mxu0 0.0
    %100 = vmatpush2.msra.mxu0 0.0
    %101 = vmatprep.subr.mxu0 0.0
    %102 = vmatpush2.msra.mxu0 0.0
    %103 = vmatprep.subr.mxu0 0.0
    %104 = vmatpush2.msra.mxu0 0.0
    %105 = vmatprep.subr.mxu0 0.0
    %106 = vmatpush2.msra.mxu0 0.0
    %107 = vmatprep.subr.mxu0 0.0
    %108 = vmatpush2.msra.mxu0 0.0
    %109 = vmatprep.subr.mxu0 0.0
    %110 = vmatpush2.msra.mxu0 0.0
    %111 = vmatprep.subr.mxu0 0.0
    %112 = vmatpush2.msra.mxu0 0.0
    %113 = vmatprep.subr.mxu0 0.0
    %114 = vmatpush2.msra.mxu0 0.0
    %115 = vmatprep.mubr.f32.mxu0 0.0
    %116 = vmatmul.mubr.f32.gmra.mxu0 %v27
    %v117 = vpop.f32.mrf.mxu0
    %v118 = vadd.f32 %v49, %v117
    %v119 = vpop.f32.mrf.mxu0
    %120 = vdwg.mxu0
    %v121 = vmax.f32 %v118, 0.0
    %v122 = vld [vmem:[%s2] sm:$0xff]
    %v123 = vld [vmem:[%s2 + $0x8] sm:$0xff]
    %v124 = vld [vmem:[%s2 + $0x10] sm:$0xff]
    %v125 = vld [vmem:[%s2 + $0x18] sm:$0xff]
    %v126 = vld [vmem:[%s2 + $0x20] sm:$0xff]
    %v127 = vld [vmem:[%s2 + $0x28] sm:$0xff]
    %v128 = vld [vmem:[%s2 + $0x30] sm:$0xff]
    %v129 = vld [vmem:[%s2 + $0x38] sm:$0xff]
    %v130 = vld [vmem:[%s2 + $0x40] sm:$0xff]
    %v131 = vld [vmem:[%s2 + $0x48] sm:$0xff]
    %v132 = vld [vmem:[%s2 + $0x50] sm:$0xff]
    %v133 = vld [vmem:[%s2 + $0x58] sm:$0xff]
    %v134 = vld [vmem:[%s2 + $0x60] sm:$0xff]
    %v135 = vld [vmem:[%s2 + $0x68] sm:$0xff]
    %v136 = vld [vmem:[%s2 + $0x70] sm:$0xff]
    %v137 = vld [vmem:[%s2 + $0x78] sm:$0xff]
    %v138 = vld [vmem:[%s5] sm:$0x1]
    %v140 = vlaneseq
    %v141 = vshrl.u32 %v140, 7
    %v142 = vsub.s32 0, %v141
    %v143 = vrot.slane %v138, %v142
    %145 = vmatprep.subr.mxu0 0.0
    %146 = vmatpush1.msra.mxu0 %v137
    %147 = vmatprep.subr.mxu0 0.0
    %148 = vmatpush1.msra.mxu0 %v136
    %149 = vmatprep.subr.mxu0 0.0
    %150 = vmatpush1.msra.mxu0 %v135
    %151 = vmatprep.subr.mxu0 0.0
    %152 = vmatpush1.msra.mxu0 %v134
    %153 = vmatprep.subr.mxu0 0.0
    %154 = vmatpush1.msra.mxu0 %v133
    %155 = vmatprep.subr.mxu0 0.0
    %156 = vmatpush1.msra.mxu0 %v132
    %157 = vmatprep.subr.mxu0 0.0
    %158 = vmatpush1.msra.mxu0 %v131
    %159 = vmatprep.subr.mxu0 0.0
    %160 = vmatpush1.msra.mxu0 %v130
    %161 = vmatprep.subr.mxu0 0.0
    %162 = vmatpush1.msra.mxu0 %v129
    %163 = vmatprep.subr.mxu0 0.0
    %164 = vmatpush1.msra.mxu0 %v128
    %165 = vmatprep.subr.mxu0 0.0
    %166 = vmatpush1.msra.mxu0 %v127
    %167 = vmatprep.subr.mxu0 0.0
    %168 = vmatpush1.msra.mxu0 %v126
    %169 = vmatprep.subr.mxu0 0.0
    %170 = vmatpush1.msra.mxu0 %v125
    %171 = vmatprep.subr.mxu0 0.0
    %172 = vmatpush1.msra.mxu0 %v124
    %173 = vmatprep.subr.mxu0 0.0
    %174 = vmatpush1.msra.mxu0 %v123
    %175 = vmatprep.subr.mxu0 0.0
    %176 = vmatpush1.msra.mxu0 %v122
    %177 = vmatprep.subr.mxu0 0.0
    %178 = vmatpush2.msra.mxu0 0.0
    %179 = vmatprep.subr.mxu0 0.0
    %180 = vmatpush2.msra.mxu0 0.0
    %181 = vmatprep.subr.mxu0 0.0
    %182 = vmatpush2.msra.mxu0 0.0
    %183 = vmatprep.subr.mxu0 0.0
    %184 = vmatpush2.msra.mxu0 0.0
    %185 = vmatprep.subr.mxu0 0.0
    %186 = vmatpush2.msra.mxu0 0.0
    %187 = vmatprep.subr.mxu0 0.0
    %188 = vmatpush2.msra.mxu0 0.0
    %189 = vmatprep.subr.mxu0 0.0
    %190 = vmatpush2.msra.mxu0 0.0
    %191 = vmatprep.subr.mxu0 0.0
    %192 = vmatpush2.msra.mxu0 0.0
    %193 = vmatprep.subr.mxu0 0.0
    %194 = vmatpush2.msra.mxu0 0.0
    %195 = vmatprep.subr.mxu0 0.0
    %196 = vmatpush2.msra.mxu0 0.0
    %197 = vmatprep.subr.mxu0 0.0
    %198 = vmatpush2.msra.mxu0 0.0
    %199 = vmatprep.subr.mxu0 0.0
    %200 = vmatpush2.msra.mxu0 0.0
    %201 = vmatprep.subr.mxu0 0.0
    %202 = vmatpush2.msra.mxu0 0.0
    %203 = vmatprep.subr.mxu0 0.0
    %204 = vmatpush2.msra.mxu0 0.0
    %205 = vmatprep.subr.mxu0 0.0
    %206 = vmatpush2.msra.mxu0 0.0
    %207 = vmatprep.subr.mxu0 0.0
    %208 = vmatpush2.msra.mxu0 0.0
    %209 = vmatprep.mubr.f32.mxu0 0.0
    %210 = vmatmul.mubr.f32.gmra.mxu0 %v121
    %v211 = vpop.f32.mrf.mxu0
    %v212 = vadd.f32 %v143, %v211
    %v213 = vpop.f32.mrf.mxu0
    %214 = vdwg.mxu0
    %v215 = vmax.f32 %v212, 0.0
    %v216 = vld [vmem:[%s3] sm:$0xff]
    %v217 = vld [vmem:[%s3 + $0x8] sm:$0xff]
    %v218 = vld [vmem:[%s3 + $0x10] sm:$0xff]
    %v219 = vld [vmem:[%s3 + $0x18] sm:$0xff]
    %v220 = vld [vmem:[%s3 + $0x20] sm:$0xff]
    %v221 = vld [vmem:[%s3 + $0x28] sm:$0xff]
    %v222 = vld [vmem:[%s3 + $0x30] sm:$0xff]
    %v223 = vld [vmem:[%s3 + $0x38] sm:$0xff]
    %v224 = vld [vmem:[%s3 + $0x40] sm:$0xff]
    %v225 = vld [vmem:[%s3 + $0x48] sm:$0xff]
    %v226 = vld [vmem:[%s3 + $0x50] sm:$0xff]
    %v227 = vld [vmem:[%s3 + $0x58] sm:$0xff]
    %v228 = vld [vmem:[%s3 + $0x60] sm:$0xff]
    %v229 = vld [vmem:[%s3 + $0x68] sm:$0xff]
    %v230 = vld [vmem:[%s3 + $0x70] sm:$0xff]
    %v231 = vld [vmem:[%s3 + $0x78] sm:$0xff]
    %v232 = vld [vmem:[%s6] sm:$0x1]
    %v234 = vlaneseq
    %v235 = vshrl.u32 %v234, 7
    %v236 = vsub.s32 0, %v235
    %v237 = vrot.slane %v232, %v236
    %239 = vmatprep.subr.mxu0 0.0
    %240 = vmatpush1.msra.mxu0 %v231
    %241 = vmatprep.subr.mxu0 0.0
    %242 = vmatpush1.msra.mxu0 %v230
    %243 = vmatprep.subr.mxu0 0.0
    %244 = vmatpush1.msra.mxu0 %v229
    %245 = vmatprep.subr.mxu0 0.0
    %246 = vmatpush1.msra.mxu0 %v228
    %247 = vmatprep.subr.mxu0 0.0
    %248 = vmatpush1.msra.mxu0 %v227
    %249 = vmatprep.subr.mxu0 0.0
    %250 = vmatpush1.msra.mxu0 %v226
    %251 = vmatprep.subr.mxu0 0.0
    %252 = vmatpush1.msra.mxu0 %v225
    %253 = vmatprep.subr.mxu0 0.0
    %254 = vmatpush1.msra.mxu0 %v224
    %255 = vmatprep.subr.mxu0 0.0
    %256 = vmatpush1.msra.mxu0 %v223
    %257 = vmatprep.subr.mxu0 0.0
    %258 = vmatpush1.msra.mxu0 %v222
    %259 = vmatprep.subr.mxu0 0.0
    %260 = vmatpush1.msra.mxu0 %v221
    %261 = vmatprep.subr.mxu0 0.0
    %262 = vmatpush1.msra.mxu0 %v220
    %263 = vmatprep.subr.mxu0 0.0
    %264 = vmatpush1.msra.mxu0 %v219
    %265 = vmatprep.subr.mxu0 0.0
    %266 = vmatpush1.msra.mxu0 %v218
    %267 = vmatprep.subr.mxu0 0.0
    %268 = vmatpush1.msra.mxu0 %v217
    %269 = vmatprep.subr.mxu0 0.0
    %270 = vmatpush1.msra.mxu0 %v216
    %271 = vmatprep.subr.mxu0 0.0
    %272 = vmatpush2.msra.mxu0 0.0
    %273 = vmatprep.subr.mxu0 0.0
    %274 = vmatpush2.msra.mxu0 0.0
    %275 = vmatprep.subr.mxu0 0.0
    %276 = vmatpush2.msra.mxu0 0.0
    %277 = vmatprep.subr.mxu0 0.0
    %278 = vmatpush2.msra.mxu0 0.0
    %279 = vmatprep.subr.mxu0 0.0
    %280 = vmatpush2.msra.mxu0 0.0
    %281 = vmatprep.subr.mxu0 0.0
    %282 = vmatpush2.msra.mxu0 0.0
    %283 = vmatprep.subr.mxu0 0.0
    %284 = vmatpush2.msra.mxu0 0.0
    %285 = vmatprep.subr.mxu0 0.0
    %286 = vmatpush2.msra.mxu0 0.0
    %287 = vmatprep.subr.mxu0 0.0
    %288 = vmatpush2.msra.mxu0 0.0
    %289 = vmatprep.subr.mxu0 0.0
    %290 = vmatpush2.msra.mxu0 0.0
    %291 = vmatprep.subr.mxu0 0.0
    %292 = vmatpush2.msra.mxu0 0.0
    %293 = vmatprep.subr.mxu0 0.0
    %294 = vmatpush2.msra.mxu0 0.0
    %295 = vmatprep.subr.mxu0 0.0
    %296 = vmatpush2.msra.mxu0 0.0
    %297 = vmatprep.subr.mxu0 0.0
    %298 = vmatpush2.msra.mxu0 0.0
    %299 = vmatprep.subr.mxu0 0.0
    %300 = vmatpush2.msra.mxu0 0.0
    %301 = vmatprep.subr.mxu0 0.0
    %302 = vmatpush2.msra.mxu0 0.0
    %303 = vmatprep.mubr.f32.mxu0 0.0
    %304 = vmatmul.mubr.f32.gmra.mxu0 %v215
    %v305 = vpop.f32.mrf.mxu0
    %v306 = vadd.f32 %v237, %v305
    %v307 = vpop.f32.mrf.mxu0
    %308 = vdwg.mxu0
    %309 = vst [vmem:[#allocation2] sm:$0xff] %v306
    // Predicated region
    $region30: #{autoencoder_forward.3} parent=1 // pred_check
      _
    $region31: #{autoencoder_forward.3} parent=1 // pred_check_branch
      %311 = sbr.rel (0) target = $region33
    $region32: #{autoencoder_forward.3} parent=1 // pred_region
      %s313 = ssub.s32 128, 128
      %314 = vsyncadd [#allocation3], %s313
      %s316 = sshll.u32 [#allocation2], 4
      %s317 = int_to_ptr.vmem [resolvable:$true] %s316
      %319 = dma.vmem_to_hbm [thread:$0]  %s317, 128, %s7, [#allocation3]
    $region33: #{autoencoder_forward.3} parent=1 // pred_fallthru
      _
    // Predicated region
    $region34: #{autoencoder_forward.3} parent=1 // pred_check
      _
    $region35: #{autoencoder_forward.3} parent=1 // pred_check_branch
      %321 = sbr.rel (0) target = $region37
    $region36: #{autoencoder_forward.3} parent=1 // pred_region
      %322 = dma.done [#allocation3], 128
    $region37: #{autoencoder_forward.3} parent=1 // pred_fallthru
      _
    %323 = vsyncpa [#allocation3], 1

// kernel: autoencoder_forward.2
$region0: #{autoencoder_forward.2}
  #allocation0 [shape = 'u32[]', space=smem, size = 0x4, offset = 0x4, fixed_abs, tag = 'smem constant byte address 0x4 - core index']
  #allocation1 [shape = 'u32[144,128]{1,0:T(1,128)}', space=vmem, size = 0x12000, scoped, tag = 'internal scratch']
  %s0 = inlined_call_operand.vmem [shape: f32[8,128], index: 0, kind: input, shape index: {}]
  %s1 = inlined_call_operand.hbm [shape: f32[128,128], index: 1, kind: input, shape index: {}]
  %s2 = inlined_call_operand.hbm [shape: f32[128,128], index: 2, kind: input, shape index: {}]
  %s3 = inlined_call_operand.hbm [shape: f32[128,128], index: 3, kind: input, shape index: {}]
  %s4 = inlined_call_operand.vmem [shape: f32[1,128], index: 4, kind: input, shape index: {}]
  %s5 = inlined_call_operand.vmem [shape: f32[1,128], index: 5, kind: input, shape index: {}]
  %s6 = inlined_call_operand.vmem [shape: f32[1,128], index: 6, kind: input, shape index: {}]
  %s7 = inlined_call_operand.vmem [shape: f32[8,128], index: 7, kind: output, shape index: {}]
  %s8 = sld [smem:[#allocation0]]
  $region50: #{autoencoder_forward.2} parent=0
    _
  %s10 = ssub.s32 1, %s8
  %s11 = scalar_select 0, %s10, %s8
  $region1: #{autoencoder_forward.2} parent=0
    #allocation2 [shape = 'u8[65536]{0}', space=vmem, size = 0x10000, scoped, tag = 'input window, operand 1, single buffered']
    #allocation3 [shape = 's32[1]{0}', space=sflag, size = 0x4, scoped, tag = 'scoped memory for autoencoder_forward.2']
    #allocation4 [shape = 'u8[65536]{0}', space=vmem, size = 0x10000, scoped, tag = 'input window, operand 2, single buffered']
    #allocation5 [shape = 's32[1]{0}', space=sflag, size = 0x4, scoped, tag = 'scoped memory for autoencoder_forward.2']
    #allocation6 [shape = 'u8[65536]{0}', space=vmem, size = 0x10000, scoped, tag = 'input window, operand 3, single buffered']
    %12 = vsyncpa [#allocation3], 0
    %13 = vsyncpa [#allocation5], 0
    // Predicated region
    $region2: #{autoencoder_forward.2} parent=1 // pred_check
      _
    $region3: #{autoencoder_forward.2} parent=1 // pred_check_branch
      %15 = sbr.rel (0) target = $region5
    $region4: #{autoencoder_forward.2} parent=1 // pred_region
      _
    $region5: #{autoencoder_forward.2} parent=1 // pred_fallthru
      _
    // Predicated region
    $region6: #{autoencoder_forward.2} parent=1 // pred_check
      _
    $region7: #{autoencoder_forward.2} parent=1 // pred_check_branch
      %17 = sbr.rel (0) target = $region9
    $region8: #{autoencoder_forward.2} parent=1 // pred_region
      %s19 = ssub.s32 2048, 2048
      %20 = vsyncadd [#allocation3], %s19
      %s21 = sshll.u32 [#allocation2], 4
      %s22 = int_to_ptr.vmem [resolvable:$true] %s21
      %27 = dma.hbm_to_vmem [thread:$0]  %s1, 2048, %s22, [#allocation3], 128, 128, 8
    $region9: #{autoencoder_forward.2} parent=1 // pred_fallthru
      _
    // Predicated region
    $region10: #{autoencoder_forward.2} parent=1 // pred_check
      _
    $region11: #{autoencoder_forward.2} parent=1 // pred_check_branch
      %29 = sbr.rel (0) target = $region13
    $region12: #{autoencoder_forward.2} parent=1 // pred_region
      %s31 = ssub.s32 2048, 2048
      %32 = vsyncadd [#allocation5], %s31
      %s33 = sshll.u32 [#allocation4], 4
      %s34 = int_to_ptr.vmem [resolvable:$true] %s33
      %39 = dma.hbm_to_vmem [thread:$0]  %s2, 2048, %s34, [#allocation5], 128, 128, 8
    $region13: #{autoencoder_forward.2} parent=1 // pred_fallthru
      _
    // Predicated region
    $region14: #{autoencoder_forward.2} parent=1 // pred_check
      _
    $region15: #{autoencoder_forward.2} parent=1 // pred_check_branch
      %41 = sbr.rel (0) target = $region17
    $region16: #{autoencoder_forward.2} parent=1 // pred_region
      %s43 = ssub.s32 2048, 2048
      %44 = vsyncadd [#allocation5], %s43
      %s45 = sshll.u32 [#allocation6], 4
      %s46 = int_to_ptr.vmem [resolvable:$true] %s45
      %51 = dma.hbm_to_vmem [thread:$0]  %s3, 2048, %s46, [#allocation5], 128, 128, 8
    $region17: #{autoencoder_forward.2} parent=1 // pred_fallthru
      _
    // Predicated region
    $region18: #{autoencoder_forward.2} parent=1 // pred_check
      _
    $region19: #{autoencoder_forward.2} parent=1 // pred_check_branch
      %53 = sbr.rel (0) target = $region21
    $region20: #{autoencoder_forward.2} parent=1 // pred_region
      _
    $region21: #{autoencoder_forward.2} parent=1 // pred_fallthru
      _
    // Predicated region
    $region22: #{autoencoder_forward.2} parent=1 // pred_check
      _
    $region23: #{autoencoder_forward.2} parent=1 // pred_check_branch
      %55 = sbr.rel (0) target = $region25
    $region24: #{autoencoder_forward.2} parent=1 // pred_region
      _
    $region25: #{autoencoder_forward.2} parent=1 // pred_fallthru
      _
    // Predicated region
    $region26: #{autoencoder_forward.2} parent=1 // pred_check
      _
    $region27: #{autoencoder_forward.2} parent=1 // pred_check_branch
      %57 = sbr.rel (0) target = $region29
    $region28: #{autoencoder_forward.2} parent=1 // pred_region
      _
    $region29: #{autoencoder_forward.2} parent=1 // pred_fallthru
      _
    // Predicated region
    $region30: #{autoencoder_forward.2} parent=1 // pred_check
      _
    $region31: #{autoencoder_forward.2} parent=1 // pred_check_branch
      %59 = sbr.rel (0) target = $region33
    $region32: #{autoencoder_forward.2} parent=1 // pred_region
      %60 = dma.done [#allocation3], 2048
    $region33: #{autoencoder_forward.2} parent=1 // pred_fallthru
      _
    // Predicated region
    $region34: #{autoencoder_forward.2} parent=1 // pred_check
      _
    $region35: #{autoencoder_forward.2} parent=1 // pred_check_branch
      %62 = sbr.rel (0) target = $region37
    $region36: #{autoencoder_forward.2} parent=1 // pred_region
      %63 = dma.done [#allocation5], 2048
    $region37: #{autoencoder_forward.2} parent=1 // pred_fallthru
      _
    // Predicated region
    $region38: #{autoencoder_forward.2} parent=1 // pred_check
      _
    $region39: #{autoencoder_forward.2} parent=1 // pred_check_branch
      %65 = sbr.rel (0) target = $region41
    $region40: #{autoencoder_forward.2} parent=1 // pred_region
      %66 = dma.done [#allocation5], 2048
    $region41: #{autoencoder_forward.2} parent=1 // pred_fallthru
      _
    %v67 = vld [vmem:[%s0] sm:$0xff]
    %v68 = vld [vmem:[#allocation2] sm:$0xff]
    %v69 = vld [vmem:[#allocation2 + $0x8] sm:$0xff]
    %v70 = vld [vmem:[#allocation2 + $0x10] sm:$0xff]
    %v71 = vld [vmem:[#allocation2 + $0x18] sm:$0xff]
    %v72 = vld [vmem:[#allocation2 + $0x20] sm:$0xff]
    %v73 = vld [vmem:[#allocation2 + $0x28] sm:$0xff]
    %v74 = vld [vmem:[#allocation2 + $0x30] sm:$0xff]
    %v75 = vld [vmem:[#allocation2 + $0x38] sm:$0xff]
    %v76 = vld [vmem:[#allocation2 + $0x40] sm:$0xff]
    %v77 = vld [vmem:[#allocation2 + $0x48] sm:$0xff]
    %v78 = vld [vmem:[#allocation2 + $0x50] sm:$0xff]
    %v79 = vld [vmem:[#allocation2 + $0x58] sm:$0xff]
    %v80 = vld [vmem:[#allocation2 + $0x60] sm:$0xff]
    %v81 = vld [vmem:[#allocation2 + $0x68] sm:$0xff]
    %v82 = vld [vmem:[#allocation2 + $0x70] sm:$0xff]
    %v83 = vld [vmem:[#allocation2 + $0x78] sm:$0xff]
    %v84 = vld [vmem:[%s4] sm:$0x1]
    %v86 = vlaneseq
    %v87 = vshrl.u32 %v86, 7
    %v88 = vsub.s32 0, %v87
    %v89 = vrot.slane %v84, %v88
    %91 = vmatprep.subr.mxu0 0.0
    %92 = vmatpush1.msra.mxu0 %v83
    %93 = vmatprep.subr.mxu0 0.0
    %94 = vmatpush1.msra.mxu0 %v82
    %95 = vmatprep.subr.mxu0 0.0
    %96 = vmatpush1.msra.mxu0 %v81
    %97 = vmatprep.subr.mxu0 0.0
    %98 = vmatpush1.msra.mxu0 %v80
    %99 = vmatprep.subr.mxu0 0.0
    %100 = vmatpush1.msra.mxu0 %v79
    %101 = vmatprep.subr.mxu0 0.0
    %102 = vmatpush1.msra.mxu0 %v78
    %103 = vmatprep.subr.mxu0 0.0
    %104 = vmatpush1.msra.mxu0 %v77
    %105 = vmatprep.subr.mxu0 0.0
    %106 = vmatpush1.msra.mxu0 %v76
    %107 = vmatprep.subr.mxu0 0.0
    %108 = vmatpush1.msra.mxu0 %v75
    %109 = vmatprep.subr.mxu0 0.0
    %110 = vmatpush1.msra.mxu0 %v74
    %111 = vmatprep.subr.mxu0 0.0
    %112 = vmatpush1.msra.mxu0 %v73
    %113 = vmatprep.subr.mxu0 0.0
    %114 = vmatpush1.msra.mxu0 %v72
    %115 = vmatprep.subr.mxu0 0.0
    %116 = vmatpush1.msra.mxu0 %v71
    %117 = vmatprep.subr.mxu0 0.0
    %118 = vmatpush1.msra.mxu0 %v70
    %119 = vmatprep.subr.mxu0 0.0
    %120 = vmatpush1.msra.mxu0 %v69
    %121 = vmatprep.subr.mxu0 0.0
    %122 = vmatpush1.msra.mxu0 %v68
    %123 = vmatprep.subr.mxu0 0.0
    %124 = vmatpush2.msra.mxu0 0.0
    %125 = vmatprep.subr.mxu0 0.0
    %126 = vmatpush2.msra.mxu0 0.0
    %127 = vmatprep.subr.mxu0 0.0
    %128 = vmatpush2.msra.mxu0 0.0
    %129 = vmatprep.subr.mxu0 0.0
    %130 = vmatpush2.msra.mxu0 0.0
    %131 = vmatprep.subr.mxu0 0.0
    %132 = vmatpush2.msra.mxu0 0.0
    %133 = vmatprep.subr.mxu0 0.0
    %134 = vmatpush2.msra.mxu0 0.0
    %135 = vmatprep.subr.mxu0 0.0
    %136 = vmatpush2.msra.mxu0 0.0
    %137 = vmatprep.subr.mxu0 0.0
    %138 = vmatpush2.msra.mxu0 0.0
    %139 = vmatprep.subr.mxu0 0.0
    %140 = vmatpush2.msra.mxu0 0.0
    %141 = vmatprep.subr.mxu0 0.0
    %142 = vmatpush2.msra.mxu0 0.0
    %143 = vmatprep.subr.mxu0 0.0
    %144 = vmatpush2.msra.mxu0 0.0
    %145 = vmatprep.subr.mxu0 0.0
    %146 = vmatpush2.msra.mxu0 0.0
    %147 = vmatprep.subr.mxu0 0.0
    %148 = vmatpush2.msra.mxu0 0.0
    %149 = vmatprep.subr.mxu0 0.0
    %150 = vmatpush2.msra.mxu0 0.0
    %151 = vmatprep.subr.mxu0 0.0
    %152 = vmatpush2.msra.mxu0 0.0
    %153 = vmatprep.subr.mxu0 0.0
    %154 = vmatpush2.msra.mxu0 0.0
    %155 = vmatprep.mubr.f32.mxu0 0.0
    %156 = vmatmul.mubr.f32.gmra.mxu0 %v67
    %v157 = vpop.f32.mrf.mxu0
    %v158 = vadd.f32 %v89, %v157
    %v159 = vpop.f32.mrf.mxu0
    %160 = vdwg.mxu0
    %v161 = vmax.f32 %v158, 0.0
    %v162 = vld [vmem:[#allocation4] sm:$0xff]
    %v163 = vld [vmem:[#allocation4 + $0x8] sm:$0xff]
    %v164 = vld [vmem:[#allocation4 + $0x10] sm:$0xff]
    %v165 = vld [vmem:[#allocation4 + $0x18] sm:$0xff]
    %v166 = vld [vmem:[#allocation4 + $0x20] sm:$0xff]
    %v167 = vld [vmem:[#allocation4 + $0x28] sm:$0xff]
    %v168 = vld [vmem:[#allocation4 + $0x30] sm:$0xff]
    %v169 = vld [vmem:[#allocation4 + $0x38] sm:$0xff]
    %v170 = vld [vmem:[#allocation4 + $0x40] sm:$0xff]
    %v171 = vld [vmem:[#allocation4 + $0x48] sm:$0xff]
    %v172 = vld [vmem:[#allocation4 + $0x50] sm:$0xff]
    %v173 = vld [vmem:[#allocation4 + $0x58] sm:$0xff]
    %v174 = vld [vmem:[#allocation4 + $0x60] sm:$0xff]
    %v175 = vld [vmem:[#allocation4 + $0x68] sm:$0xff]
    %v176 = vld [vmem:[#allocation4 + $0x70] sm:$0xff]
    %v177 = vld [vmem:[#allocation4 + $0x78] sm:$0xff]
    %v178 = vld [vmem:[%s5] sm:$0x1]
    %v180 = vlaneseq
    %v181 = vshrl.u32 %v180, 7
    %v182 = vsub.s32 0, %v181
    %v183 = vrot.slane %v178, %v182
    %185 = vmatprep.subr.mxu0 0.0
    %186 = vmatpush1.msra.mxu0 %v177
    %187 = vmatprep.subr.mxu0 0.0
    %188 = vmatpush1.msra.mxu0 %v176
    %189 = vmatprep.subr.mxu0 0.0
    %190 = vmatpush1.msra.mxu0 %v175
    %191 = vmatprep.subr.mxu0 0.0
    %192 = vmatpush1.msra.mxu0 %v174
    %193 = vmatprep.subr.mxu0 0.0
    %194 = vmatpush1.msra.mxu0 %v173
    %195 = vmatprep.subr.mxu0 0.0
    %196 = vmatpush1.msra.mxu0 %v172
    %197 = vmatprep.subr.mxu0 0.0
    %198 = vmatpush1.msra.mxu0 %v171
    %199 = vmatprep.subr.mxu0 0.0
    %200 = vmatpush1.msra.mxu0 %v170
    %201 = vmatprep.subr.mxu0 0.0
    %202 = vmatpush1.msra.mxu0 %v169
    %203 = vmatprep.subr.mxu0 0.0
    %204 = vmatpush1.msra.mxu0 %v168
    %205 = vmatprep.subr.mxu0 0.0
    %206 = vmatpush1.msra.mxu0 %v167
    %207 = vmatprep.subr.mxu0 0.0
    %208 = vmatpush1.msra.mxu0 %v166
    %209 = vmatprep.subr.mxu0 0.0
    %210 = vmatpush1.msra.mxu0 %v165
    %211 = vmatprep.subr.mxu0 0.0
    %212 = vmatpush1.msra.mxu0 %v164
    %213 = vmatprep.subr.mxu0 0.0
    %214 = vmatpush1.msra.mxu0 %v163
    %215 = vmatprep.subr.mxu0 0.0
    %216 = vmatpush1.msra.mxu0 %v162
    %217 = vmatprep.subr.mxu0 0.0
    %218 = vmatpush2.msra.mxu0 0.0
    %219 = vmatprep.subr.mxu0 0.0
    %220 = vmatpush2.msra.mxu0 0.0
    %221 = vmatprep.subr.mxu0 0.0
    %222 = vmatpush2.msra.mxu0 0.0
    %223 = vmatprep.subr.mxu0 0.0
    %224 = vmatpush2.msra.mxu0 0.0
    %225 = vmatprep.subr.mxu0 0.0
    %226 = vmatpush2.msra.mxu0 0.0
    %227 = vmatprep.subr.mxu0 0.0
    %228 = vmatpush2.msra.mxu0 0.0
    %229 = vmatprep.subr.mxu0 0.0
    %230 = vmatpush2.msra.mxu0 0.0
    %231 = vmatprep.subr.mxu0 0.0
    %232 = vmatpush2.msra.mxu0 0.0
    %233 = vmatprep.subr.mxu0 0.0
    %234 = vmatpush2.msra.mxu0 0.0
    %235 = vmatprep.subr.mxu0 0.0
    %236 = vmatpush2.msra.mxu0 0.0
    %237 = vmatprep.subr.mxu0 0.0
    %238 = vmatpush2.msra.mxu0 0.0
    %239 = vmatprep.subr.mxu0 0.0
    %240 = vmatpush2.msra.mxu0 0.0
    %241 = vmatprep.subr.mxu0 0.0
    %242 = vmatpush2.msra.mxu0 0.0
    %243 = vmatprep.subr.mxu0 0.0
    %244 = vmatpush2.msra.mxu0 0.0
    %245 = vmatprep.subr.mxu0 0.0
    %246 = vmatpush2.msra.mxu0 0.0
    %247 = vmatprep.subr.mxu0 0.0
    %248 = vmatpush2.msra.mxu0 0.0
    %249 = vmatprep.mubr.f32.mxu0 0.0
    %250 = vmatmul.mubr.f32.gmra.mxu0 %v161
    %v251 = vpop.f32.mrf.mxu0
    %v252 = vadd.f32 %v183, %v251
    %v253 = vpop.f32.mrf.mxu0
    %254 = vdwg.mxu0
    %v255 = vmax.f32 %v252, 0.0
    %v256 = vld [vmem:[#allocation6] sm:$0xff]
    %v257 = vld [vmem:[#allocation6 + $0x8] sm:$0xff]
    %v258 = vld [vmem:[#allocation6 + $0x10] sm:$0xff]
    %v259 = vld [vmem:[#allocation6 + $0x18] sm:$0xff]
    %v260 = vld [vmem:[#allocation6 + $0x20] sm:$0xff]
    %v261 = vld [vmem:[#allocation6 + $0x28] sm:$0xff]
    %v262 = vld [vmem:[#allocation6 + $0x30] sm:$0xff]
    %v263 = vld [vmem:[#allocation6 + $0x38] sm:$0xff]
    %v264 = vld [vmem:[#allocation6 + $0x40] sm:$0xff]
    %v265 = vld [vmem:[#allocation6 + $0x48] sm:$0xff]
    %v266 = vld [vmem:[#allocation6 + $0x50] sm:$0xff]
    %v267 = vld [vmem:[#allocation6 + $0x58] sm:$0xff]
    %v268 = vld [vmem:[#allocation6 + $0x60] sm:$0xff]
    %v269 = vld [vmem:[#allocation6 + $0x68] sm:$0xff]
    %v270 = vld [vmem:[#allocation6 + $0x70] sm:$0xff]
    %v271 = vld [vmem:[#allocation6 + $0x78] sm:$0xff]
    %v272 = vld [vmem:[%s6] sm:$0x1]
    %v274 = vlaneseq
    %v275 = vshrl.u32 %v274, 7
    %v276 = vsub.s32 0, %v275
    %v277 = vrot.slane %v272, %v276
    %279 = vmatprep.subr.mxu0 0.0
    %280 = vmatpush1.msra.mxu0 %v271
    %281 = vmatprep.subr.mxu0 0.0
    %282 = vmatpush1.msra.mxu0 %v270
    %283 = vmatprep.subr.mxu0 0.0
    %284 = vmatpush1.msra.mxu0 %v269
    %285 = vmatprep.subr.mxu0 0.0
    %286 = vmatpush1.msra.mxu0 %v268
    %287 = vmatprep.subr.mxu0 0.0
    %288 = vmatpush1.msra.mxu0 %v267
    %289 = vmatprep.subr.mxu0 0.0
    %290 = vmatpush1.msra.mxu0 %v266
    %291 = vmatprep.subr.mxu0 0.0
    %292 = vmatpush1.msra.mxu0 %v265
    %293 = vmatprep.subr.mxu0 0.0
    %294 = vmatpush1.msra.mxu0 %v264
    %295 = vmatprep.subr.mxu0 0.0
    %296 = vmatpush1.msra.mxu0 %v263
    %297 = vmatprep.subr.mxu0 0.0
    %298 = vmatpush1.msra.mxu0 %v262
    %299 = vmatprep.subr.mxu0 0.0
    %300 = vmatpush1.msra.mxu0 %v261
    %301 = vmatprep.subr.mxu0 0.0
    %302 = vmatpush1.msra.mxu0 %v260
    %303 = vmatprep.subr.mxu0 0.0
    %304 = vmatpush1.msra.mxu0 %v259
    %305 = vmatprep.subr.mxu0 0.0
    %306 = vmatpush1.msra.mxu0 %v258
    %307 = vmatprep.subr.mxu0 0.0
    %308 = vmatpush1.msra.mxu0 %v257
    %309 = vmatprep.subr.mxu0 0.0
    %310 = vmatpush1.msra.mxu0 %v256
    %311 = vmatprep.subr.mxu0 0.0
    %312 = vmatpush2.msra.mxu0 0.0
    %313 = vmatprep.subr.mxu0 0.0
    %314 = vmatpush2.msra.mxu0 0.0
    %315 = vmatprep.subr.mxu0 0.0
    %316 = vmatpush2.msra.mxu0 0.0
    %317 = vmatprep.subr.mxu0 0.0
    %318 = vmatpush2.msra.mxu0 0.0
    %319 = vmatprep.subr.mxu0 0.0
    %320 = vmatpush2.msra.mxu0 0.0
    %321 = vmatprep.subr.mxu0 0.0
    %322 = vmatpush2.msra.mxu0 0.0
    %323 = vmatprep.subr.mxu0 0.0
    %324 = vmatpush2.msra.mxu0 0.0
    %325 = vmatprep.subr.mxu0 0.0
    %326 = vmatpush2.msra.mxu0 0.0
    %327 = vmatprep.subr.mxu0 0.0
    %328 = vmatpush2.msra.mxu0 0.0
    %329 = vmatprep.subr.mxu0 0.0
    %330 = vmatpush2.msra.mxu0 0.0
    %331 = vmatprep.subr.mxu0 0.0
    %332 = vmatpush2.msra.mxu0 0.0
    %333 = vmatprep.subr.mxu0 0.0
    %334 = vmatpush2.msra.mxu0 0.0
    %335 = vmatprep.subr.mxu0 0.0
    %336 = vmatpush2.msra.mxu0 0.0
    %337 = vmatprep.subr.mxu0 0.0
    %338 = vmatpush2.msra.mxu0 0.0
    %339 = vmatprep.subr.mxu0 0.0
    %340 = vmatpush2.msra.mxu0 0.0
    %341 = vmatprep.subr.mxu0 0.0
    %342 = vmatpush2.msra.mxu0 0.0
    %343 = vmatprep.mubr.f32.mxu0 0.0
    %344 = vmatmul.mubr.f32.gmra.mxu0 %v255
    %v345 = vpop.f32.mrf.mxu0
    %v346 = vadd.f32 %v277, %v345
    %v347 = vpop.f32.mrf.mxu0
    %348 = vdwg.mxu0
    %349 = vst [vmem:[%s7] sm:$0xff] %v346
    // Predicated region
    $region42: #{autoencoder_forward.2} parent=1 // pred_check
      _
    $region43: #{autoencoder_forward.2} parent=1 // pred_check_branch
      %351 = sbr.rel (0) target = $region45
    $region44: #{autoencoder_forward.2} parent=1 // pred_region
      _
    $region45: #{autoencoder_forward.2} parent=1 // pred_fallthru
      _
    // Predicated region
    $region46: #{autoencoder_forward.2} parent=1 // pred_check
      _
    $region47: #{autoencoder_forward.2} parent=1 // pred_check_branch
      %353 = sbr.rel (0) target = $region49
    $region48: #{autoencoder_forward.2} parent=1 // pred_region
      _
    $region49: #{autoencoder_forward.2} parent=1 // pred_fallthru
      _
    %354 = vsyncpa [#allocation3], 1
    %355 = vsyncpa [#allocation5], 1

</llo_original>
